<compile_context>
chip_gen: v7x
topology: tpu7x:2x2x1
jax: 0.10.0
libtpu: 0.0.40
codegen_flags: <defaults>
</compile_context>

<pallas_src>
import jax
import jax.numpy as jnp
from jax.experimental import pallas as pl
from jax.experimental.pallas import tpu as pltpu  # noqa: F401  (kept for TPU-specific tuning hooks)

_REPS = 8  # torch.cat([v1] * 8, dim=1)


def _model_kernel(x1_ref, x2_ref, t1_ref):
    # Single surviving matmul on the MXU with f32 accumulation.
    v1 = jnp.dot(x1_ref[...], x2_ref[...], preferred_element_type=jnp.float32)
    v1 = v1.astype(t1_ref.dtype)
    n = v1.shape[1]
    # Replicate v1 eight times along the last (lane) axis via unrolled static
    # slice stores -- avoids building an (M, 8N) concatenated temporary and
    # lets the store slot pipeline the writes.
    for i in range(_REPS):
        t1_ref[:, i * n:(i + 1) * n] = v1


def model_forward(x1, x2):
    M, K = x1.shape
    K2, N = x2.shape
    assert K == K2, "inner dims must match"

    out_shape = jax.ShapeDtypeStruct((M, _REPS * N), x1.dtype)
    itemsize = jnp.dtype(x1.dtype).itemsize
    cost = pl.CostEstimate(
        flops=2 * M * K * N,
        transcendentals=0,
        bytes_accessed=(M * K + K * N + M * _REPS * N) * itemsize,
    )

    return pl.pallas_call(
        _model_kernel,
        out_shape=out_shape,
        # Small matrices: full-array blocks (block shape == array shape is
        # always legal), single grid point, everything resident in VMEM.
        in_specs=[
            pl.BlockSpec((M, K), lambda: (0, 0)),
            pl.BlockSpec((K2, N), lambda: (0, 0)),
        ],
        out_specs=pl.BlockSpec((M, _REPS * N), lambda: (0, 0)),
        cost_estimate=cost,
    )(x1, x2)


def _reference(x1, x2):
    v1 = x1 @ x2
    return jnp.concatenate([v1] * _REPS, axis=1)


if __name__ == "__main__":
    key = jax.random.PRNGKey(0)
    k1, k2 = jax.random.split(key)
    # Small shapes consistent with the module (general M,K,N; x1 need not be
    # square since only t1 = cat([x1@x2]*8, 1) is returned).  N=16 makes the
    # output last dim 8*16 = 128, i.e. exactly one lane-dense vreg width.
    M, K, N = 8, 16, 16
    x1 = jax.random.normal(k1, (M, K), dtype=jnp.float32)
    x2 = jax.random.normal(k2, (K, N), dtype=jnp.float32)

    out = model_forward(x1, x2)
    jax.block_until_ready(out)

    ref = _reference(x1, x2)
    assert out.shape == (M, _REPS * N), out.shape
    assert jnp.allclose(out, ref, atol=1e-5, rtol=1e-5)
    print("KERNEL_OK")
</pallas_src>

<mosaic_0001>
module attributes {stable_mosaic.version = 11 : i64} {
  func.func @_model_kernel(%arg0: memref<8x16xf32, #tpu.memory_space<vmem>>, %arg1: memref<16x16xf32, #tpu.memory_space<vmem>>, %arg2: memref<8x128xf32, #tpu.memory_space<vmem>>) attributes {dimension_semantics = [], scalar_prefetch = 0 : i64, scratch_operands = 0 : i64, tpu.core_type = #tpu.core_type<tc>} {
    %c0 = arith.constant 0 : index
    %c0_0 = arith.constant 0 : index
    %0 = vector.load %arg0[%c0, %c0_0] : memref<8x16xf32, #tpu.memory_space<vmem>>, vector<8x16xf32>
    %c0_1 = arith.constant 0 : index
    %c0_2 = arith.constant 0 : index
    %1 = vector.load %arg1[%c0_1, %c0_2] : memref<16x16xf32, #tpu.memory_space<vmem>>, vector<16x16xf32>
    %cst = arith.constant dense<0.000000e+00> : vector<8x16xf32>
    %2 = tpu.matmul %0, %1, %cst {dimension_numbers = #tpu.dot_dimension_numbers<[1], [0], [0], [1], [0, 0, 1, 1], [], []>} : vector<8x16xf32>, vector<16x16xf32>, vector<8x16xf32> -> vector<8x16xf32>
    %c0_3 = arith.constant 0 : index
    %c0_4 = arith.constant 0 : index
    %3 = vector.load %arg2[%c0_3, %c0_4] : memref<8x128xf32, #tpu.memory_space<vmem>>, vector<8x16xf32>
    tpu.vector_store %arg2[%c0_3, %c0_4], %2 {strides = array<i32>} : memref<8x128xf32, #tpu.memory_space<vmem>>, vector<8x16xf32>,
    %c0_5 = arith.constant 0 : index
    %c16 = arith.constant 16 : index
    %4 = vector.load %arg2[%c0_5, %c16] : memref<8x128xf32, #tpu.memory_space<vmem>>, vector<8x16xf32>
    tpu.vector_store %arg2[%c0_5, %c16], %2 {strides = array<i32>} : memref<8x128xf32, #tpu.memory_space<vmem>>, vector<8x16xf32>,
    %c0_6 = arith.constant 0 : index
    %c32 = arith.constant 32 : index
    %5 = vector.load %arg2[%c0_6, %c32] : memref<8x128xf32, #tpu.memory_space<vmem>>, vector<8x16xf32>
    tpu.vector_store %arg2[%c0_6, %c32], %2 {strides = array<i32>} : memref<8x128xf32, #tpu.memory_space<vmem>>, vector<8x16xf32>,
    %c0_7 = arith.constant 0 : index
    %c48 = arith.constant 48 : index
    %6 = vector.load %arg2[%c0_7, %c48] : memref<8x128xf32, #tpu.memory_space<vmem>>, vector<8x16xf32>
    tpu.vector_store %arg2[%c0_7, %c48], %2 {strides = array<i32>} : memref<8x128xf32, #tpu.memory_space<vmem>>, vector<8x16xf32>,
    %c0_8 = arith.constant 0 : index
    %c64 = arith.constant 64 : index
    %7 = vector.load %arg2[%c0_8, %c64] : memref<8x128xf32, #tpu.memory_space<vmem>>, vector<8x16xf32>
    tpu.vector_store %arg2[%c0_8, %c64], %2 {strides = array<i32>} : memref<8x128xf32, #tpu.memory_space<vmem>>, vector<8x16xf32>,
    %c0_9 = arith.constant 0 : index
    %c80 = arith.constant 80 : index
    %8 = vector.load %arg2[%c0_9, %c80] : memref<8x128xf32, #tpu.memory_space<vmem>>, vector<8x16xf32>
    tpu.vector_store %arg2[%c0_9, %c80], %2 {strides = array<i32>} : memref<8x128xf32, #tpu.memory_space<vmem>>, vector<8x16xf32>,
    %c0_10 = arith.constant 0 : index
    %c96 = arith.constant 96 : index
    %9 = vector.load %arg2[%c0_10, %c96] : memref<8x128xf32, #tpu.memory_space<vmem>>, vector<8x16xf32>
    tpu.vector_store %arg2[%c0_10, %c96], %2 {strides = array<i32>} : memref<8x128xf32, #tpu.memory_space<vmem>>, vector<8x16xf32>,
    %c0_11 = arith.constant 0 : index
    %c112 = arith.constant 112 : index
    %10 = vector.load %arg2[%c0_11, %c112] : memref<8x128xf32, #tpu.memory_space<vmem>>, vector<8x16xf32>
    tpu.vector_store %arg2[%c0_11, %c112], %2 {strides = array<i32>} : memref<8x128xf32, #tpu.memory_space<vmem>>, vector<8x16xf32>,
    return
  }
}

</mosaic_0001>

<llo_original>
// kernel: tpu_custom_call.1
$region0: #{tpu_custom_call.1}
  #allocation0 [shape = 'u32[]', space=smem, size = 0x4, offset = 0x4, fixed_abs, tag = 'smem constant byte address 0x4 - core index']
  #allocation1 [shape = 'u32[144,128]{1,0:T(1,128)}', space=vmem, size = 0x12000, scoped, tag = 'internal scratch']
  %s0 = inlined_call_operand.hbm [shape: f32[8,16], index: 0, kind: input, shape index: {}]
  %s1 = inlined_call_operand.hbm [shape: f32[16,16], index: 1, kind: input, shape index: {}]
  %s2 = inlined_call_operand.hbm [shape: f32[8,128], index: 2, kind: output, shape index: {}]
  %s3 = sld [smem:[#allocation0]]
  $region26: #{tpu_custom_call.1} parent=0
    _
  %s5 = ssub.s32 1, %s3
  %s6 = scalar_select 0, %s5, %s3
  $region1: #{tpu_custom_call.1} parent=0
    #allocation2 [shape = 'u8[4096]{0}', space=vmem, size = 0x1000, scoped, tag = 'input window, operand 0, single buffered']
    #allocation3 [shape = 's32[1]{0}', space=sflag, size = 0x4, scoped, tag = 'scoped memory for tpu_custom_call.1']
    #allocation4 [shape = 's32[1]{0}', space=sflag, size = 0x4, scoped, tag = 'scoped memory for tpu_custom_call.1']
    #allocation5 [shape = 'u8[8192]{0}', space=vmem, size = 0x2000, scoped, tag = 'input window, operand 1, single buffered']
    #allocation6 [shape = 's32[1]{0}', space=sflag, size = 0x4, scoped, tag = 'scoped memory for tpu_custom_call.1']
    #allocation7 [shape = 'u8[4096]{0}', space=vmem, size = 0x1000, scoped, tag = 'output window, operand 0, single buffered']
    %7 = vsyncpa [#allocation3], 0
    %8 = vsyncpa [#allocation6], 0
    %9 = vsyncpa [#allocation4], 0
    // Predicated region
    $region2: #{tpu_custom_call.1} parent=1 // pred_check
      _
    $region3: #{tpu_custom_call.1} parent=1 // pred_check_branch
      %11 = sbr.rel (0) target = $region5
    $region4: #{tpu_custom_call.1} parent=1 // pred_region
      %s13 = ssub.s32 128, 128
      %14 = vsyncadd [#allocation3], %s13
      %s16 = sshll.u32 [#allocation2], 4
      %s17 = int_to_ptr.vmem [resolvable:$true] %s16
      %19 = dma.hbm_to_vmem [thread:$0]  %s0, 128, %s17, [#allocation3]
    $region5: #{tpu_custom_call.1} parent=1 // pred_fallthru
      _
    // Predicated region
    $region6: #{tpu_custom_call.1} parent=1 // pred_check
      _
    $region7: #{tpu_custom_call.1} parent=1 // pred_check_branch
      %21 = sbr.rel (0) target = $region9
    $region8: #{tpu_custom_call.1} parent=1 // pred_region
      %s23 = ssub.s32 256, 256
      %24 = vsyncadd [#allocation6], %s23
      %s25 = sshll.u32 [#allocation5], 4
      %s26 = int_to_ptr.vmem [resolvable:$true] %s25
      %31 = dma.hbm_to_vmem [thread:$0]  %s1, 256, %s26, [#allocation6], 128, 128, 8
    $region9: #{tpu_custom_call.1} parent=1 // pred_fallthru
      _
    // Predicated region
    $region10: #{tpu_custom_call.1} parent=1 // pred_check
      _
    $region11: #{tpu_custom_call.1} parent=1 // pred_check_branch
      %33 = sbr.rel (0) target = $region13
    $region12: #{tpu_custom_call.1} parent=1 // pred_region
      %34 = dma.done [#allocation3], 128
    $region13: #{tpu_custom_call.1} parent=1 // pred_fallthru
      _
    // Predicated region
    $region14: #{tpu_custom_call.1} parent=1 // pred_check
      _
    $region15: #{tpu_custom_call.1} parent=1 // pred_check_branch
      %36 = sbr.rel (0) target = $region17
    $region16: #{tpu_custom_call.1} parent=1 // pred_region
      %37 = dma.done [#allocation6], 256
    $region17: #{tpu_custom_call.1} parent=1 // pred_fallthru
      _
    %v38 = vld [vmem:[#allocation2] sm:$0xff]
    %v39 = vld [vmem:[#allocation5] sm:$0xff]
    %v40 = vld [vmem:[#allocation5 + $0x8] sm:$0xff]
    %vm41 = vcmask 130048
    %v43 = vsel %vm41, %v38, 0
    %45 = vmatprep.subr.mxu0 0.0
    %46 = vmatpush1.msra.mxu0 %v39
    %47 = vmatprep.subr.mxu0 0.0
    %48 = vmatpush1.msra.mxu0 %v40
    %49 = vmatprep.subr.mxu0 0.0
    %50 = vmatpush1.msra.mxu0 0.0
    %51 = vmatprep.subr.mxu0 0.0
    %52 = vmatpush1.msra.mxu0 0.0
    %53 = vmatprep.subr.mxu0 0.0
    %54 = vmatpush1.msra.mxu0 0.0
    %55 = vmatprep.subr.mxu0 0.0
    %56 = vmatpush1.msra.mxu0 0.0
    %57 = vmatprep.subr.mxu0 0.0
    %58 = vmatpush1.msra.mxu0 0.0
    %59 = vmatprep.subr.mxu0 0.0
    %60 = vmatpush1.msra.mxu0 0.0
    %61 = vmatprep.subr.mxu0 0.0
    %62 = vmatpush1.msra.mxu0 0.0
    %63 = vmatprep.subr.mxu0 0.0
    %64 = vmatpush1.msra.mxu0 0.0
    %65 = vmatprep.subr.mxu0 0.0
    %66 = vmatpush1.msra.mxu0 0.0
    %67 = vmatprep.subr.mxu0 0.0
    %68 = vmatpush1.msra.mxu0 0.0
    %69 = vmatprep.subr.mxu0 0.0
    %70 = vmatpush1.msra.mxu0 0.0
    %71 = vmatprep.subr.mxu0 0.0
    %72 = vmatpush1.msra.mxu0 0.0
    %73 = vmatprep.subr.mxu0 0.0
    %74 = vmatpush1.msra.mxu0 0.0
    %75 = vmatprep.subr.mxu0 0.0
    %76 = vmatpush1.msra.mxu0 0.0
    %77 = vmatprep.subr.mxu0 0.0
    %78 = vmatpush1.msra.mxu0 0.0
    %79 = vmatprep.subr.mxu0 0.0
    %80 = vmatpush1.msra.mxu0 0.0
    %81 = vmatprep.subr.mxu0 0.0
    %82 = vmatpush1.msra.mxu0 0.0
    %83 = vmatprep.subr.mxu0 0.0
    %84 = vmatpush1.msra.mxu0 0.0
    %85 = vmatprep.subr.mxu0 0.0
    %86 = vmatpush1.msra.mxu0 0.0
    %87 = vmatprep.subr.mxu0 0.0
    %88 = vmatpush1.msra.mxu0 0.0
    %89 = vmatprep.subr.mxu0 0.0
    %90 = vmatpush1.msra.mxu0 0.0
    %91 = vmatprep.subr.mxu0 0.0
    %92 = vmatpush1.msra.mxu0 0.0
    %93 = vmatprep.subr.mxu0 0.0
    %94 = vmatpush1.msra.mxu0 0.0
    %95 = vmatprep.subr.mxu0 0.0
    %96 = vmatpush1.msra.mxu0 0.0
    %97 = vmatprep.subr.mxu0 0.0
    %98 = vmatpush1.msra.mxu0 0.0
    %99 = vmatprep.subr.mxu0 0.0
    %100 = vmatpush1.msra.mxu0 0.0
    %101 = vmatprep.subr.mxu0 0.0
    %102 = vmatpush1.msra.mxu0 0.0
    %103 = vmatprep.subr.mxu0 0.0
    %104 = vmatpush1.msra.mxu0 0.0
    %105 = vmatprep.subr.mxu0 0.0
    %106 = vmatpush1.msra.mxu0 0.0
    %107 = vmatprep.subr.mxu0 0.0
    %108 = vmatpush1.msra.mxu0 0.0
    %109 = vmatprep.mubr.f32.mxu0 0.0
    %110 = vmatmul.mubr.f32.gmra.mrb[0].mxu0 %v43
    %v111 = vpop.f32.mrb[0].mxu0
    %v112 = vadd.f32 0.0, %v111
    %v113 = vpop.f32.mrb[0].mxu0
    %114 = vdwg.mxu0
    %115 = vst.msk [vmem:[#allocation7] sm:$0xff] %vm41, %v112
    %117 = vrot.lane.b32.xlu0 %v112, 16
    %v118 = vpop.permute.xlu0 %117
    %vm120 = vcmask 261248
    %121 = vst.msk [vmem:[#allocation7] sm:$0xff] %vm120, %v118
    %122 = vrot.lane.b32.xlu0 %v112, 32
    %v123 = vpop.permute.xlu0 %122
    %vm125 = vcmask 392448
    %126 = vst.msk [vmem:[#allocation7] sm:$0xff] %vm125, %v123
    %127 = vrot.lane.b32.xlu0 %v112, 48
    %v128 = vpop.permute.xlu0 %127
    %vm130 = vcmask 523648
    %131 = vst.msk [vmem:[#allocation7] sm:$0xff] %vm130, %v128
    %132 = vrot.lane.b32.xlu0 %v112, 64
    %v133 = vpop.permute.xlu0 %132
    %vm135 = vcmask 654848
    %136 = vst.msk [vmem:[#allocation7] sm:$0xff] %vm135, %v133
    %137 = vrot.lane.b32.xlu0 %v112, 80
    %v138 = vpop.permute.xlu0 %137
    %vm140 = vcmask 786048
    %141 = vst.msk [vmem:[#allocation7] sm:$0xff] %vm140, %v138
    %142 = vrot.lane.b32.xlu0 %v112, 96
    %v143 = vpop.permute.xlu0 %142
    %vm145 = vcmask 917248
    %146 = vst.msk [vmem:[#allocation7] sm:$0xff] %vm145, %v143
    %147 = vrot.lane.b32.xlu0 %v112, 112
    %v148 = vpop.permute.xlu0 %147
    %vm150 = vcmask 1048448
    %151 = vst.msk [vmem:[#allocation7] sm:$0xff] %vm150, %v148
    // Predicated region
    $region18: #{tpu_custom_call.1} parent=1 // pred_check
      _
    $region19: #{tpu_custom_call.1} parent=1 // pred_check_branch
      %153 = sbr.rel (0) target = $region21
    $region20: #{tpu_custom_call.1} parent=1 // pred_region
      %s155 = ssub.s32 128, 128
      %156 = vsyncadd [#allocation4], %s155
      %s158 = sshll.u32 [#allocation7], 4
      %s159 = int_to_ptr.vmem [resolvable:$true] %s158
      %161 = dma.vmem_to_hbm [thread:$0]  %s159, 128, %s2, [#allocation4]
    $region21: #{tpu_custom_call.1} parent=1 // pred_fallthru
      _
    // Predicated region
    $region22: #{tpu_custom_call.1} parent=1 // pred_check
      _
    $region23: #{tpu_custom_call.1} parent=1 // pred_check_branch
      %163 = sbr.rel (0) target = $region25
    $region24: #{tpu_custom_call.1} parent=1 // pred_region
      %164 = dma.done [#allocation4], 128
    $region25: #{tpu_custom_call.1} parent=1 // pred_fallthru
      _
    %165 = vsyncpa [#allocation3], 1
    %166 = vsyncpa [#allocation6], 1
    %167 = vsyncpa [#allocation4], 1

</llo_original>
